<compile_context>
chip_gen: v7x
topology: tpu7x:2x2x1
jax: 0.10.0
libtpu: 0.0.40
codegen_flags: <defaults>
</compile_context>

<pallas_src>
import functools

import jax
import jax.numpy as jnp
from jax import lax
from jax.experimental import pallas as pl
from jax.experimental.pallas import tpu as pltpu

EPS = 1e-7         # Hyperboloid.eps[float32]
MIN_NORM = 1e-15   # manifold.min_norm
TANH_CLAMP = 15.0
SQDIST_CLAMP = 50.0
EDGE_THRESH = 0.01

_DEFAULT_TILE = 512        # src/tgt tile (multiple of 128); sweep 256..1024 per generation
_MAX_SINGLE_TILE = 256     # below this, the whole problem fits in one grid step
_VMEM_HARD_LIMIT = 60 * 1024 * 1024   # v7x-safe (64 MiB/TC) with headroom


def _round_up(a, b):
    return (a + b - 1) // b * b


def _feat0_mask(shape, axis, dtype):
    """1.0 where the index along `axis` is 0 (the hyperboloid time-like coordinate)."""
    return (lax.broadcasted_iota(jnp.int32, shape, axis) == 0).astype(dtype)


# --------------------- manifold math (pure jnp; usable inside and outside kernels) ------

def _arcosh_nc(x):
    # caller guarantees x >= 1 + EPS
    return jnp.log(x + jnp.sqrt(x * x - 1.0))


def _artanh(x):
    x = jnp.clip(x, -1.0 + EPS, 1.0 - EPS)
    return 0.5 * jnp.log((1.0 + x) / (1.0 - x))


def _sinh(x):
    x = jnp.clip(x, -TANH_CLAMP, TANH_CLAMP)
    return 0.5 * (jnp.exp(x) - jnp.exp(-x))


def _hyp_logmap0(x, c):
    """Hyperboloid.logmap0: hyperboloid point -> tangent space at origin (col 0 == 0)."""
    K = 1.0 / c
    sqrtK = K ** 0.5
    col0 = _feat0_mask(x.shape, x.ndim - 1, x.dtype)
    tail = x * (1.0 - col0)
    x0 = jnp.sum(x * col0, axis=-1, keepdims=True)
    y_norm = jnp.maximum(jnp.sqrt(jnp.sum(tail * tail, axis=-1, keepdims=True)), MIN_NORM)
    theta = jnp.maximum(x0 / sqrtK, 1.0 + EPS)
    return tail * (sqrtK * _arcosh_nc(theta) / y_norm)


def _hyp_expmap0_proj(u, c):
    """Hyperboloid.proj(Hyperboloid.expmap0(u)); column 0 of u is ignored (as in proj)."""
    K = 1.0 / c
    sqrtK = K ** 0.5
    col0 = _feat0_mask(u.shape, u.ndim - 1, u.dtype)
    tail = u * (1.0 - col0)
    n = jnp.maximum(jnp.sqrt(jnp.sum(tail * tail, axis=-1, keepdims=True)), MIN_NORM)
    res_tail = sqrtK * _sinh(n / sqrtK) * tail / n
    y_sq = jnp.sum(res_tail * res_tail, axis=-1, keepdims=True)
    x0 = jnp.sqrt(jnp.maximum(K + y_sq, EPS))
    return x0 * col0 + res_tail


def _hyp_linear(x, w, c):
    """HypLinear with use_bias=False: proj(expmap0(logmap0(x) @ w.T))."""
    u = _hyp_logmap0(x, c)
    mu = lax.dot_general(u, w, (((1,), (1,)), ((), ())),
                         preferred_element_type=jnp.float32)
    return _hyp_expmap0_proj(mu, c)


def _attention_rhs_t(h, c):
    """Fused aggregation RHS, precomputed and transposed (f32).

    Rows 0..D-1: (lam * v)^T with v = PoincareBall().from_hyperboloid(h) (feature-0 row == 0)
    Row  D:      (lam - 1)^T
    """
    K = 1.0 / c
    sqrtK = K ** 0.5
    x0 = h[:, 0:1]
    v_tail = sqrtK * h[:, 1:] / (x0 + sqrtK)
    v = jnp.concatenate([jnp.zeros_like(x0), v_tail], axis=-1)     # (N, D), col 0 == 0
    v_sq = jnp.sum(v * v, axis=-1, keepdims=True)
    lam = 2.0 / jnp.maximum(1.0 - v_sq, MIN_NORM)                  # conformal factor (c=1 ball)
    rhs = jnp.concatenate([v * lam, lam - 1.0], axis=-1)           # (N, D+1)
    return rhs.T.astype(jnp.float32)                               # (D+1, N)


# ------------------------------------ Pallas kernel --------------------------------------

def _mha_attention_kernel(nnz_ref, adj_ref, h_tgt_ref, h_src_ref, rhs_ref,
                          out_ref, acc_ref, *, c, dout, nheads, use_act):
    """(src_tile, tgt_tile) step of multi-head hyperbolic self-attention.

    nnz_ref:   (NBt, NBs) i32 SMEM   per-block count of edges > 0.01 (scalar prefetch)
    adj_ref:   (T, T)     bf16       adj[tgt_tile, src_tile]
    h_tgt_ref: (H, T, D)  f32        per-head HypLinear embeddings, target-node tile
    h_src_ref: (H, T, D)  f32        same embeddings, source-node tile (constant over tgt axis)
    rhs_ref:   (H, D+1, T) f32       fused gyromidpoint aggregation RHS, target-node tile
    out_ref:   (H, D, T)  f32        per-head attention embeddings (feature-major, lane = src)
    acc_ref:   (H, D+1, T) f32 VMEM  num/den accumulator across target tiles
    """
    K = 1.0 / c
    sqrtK = K ** 0.5
    s = pl.program_id(0)
    t = pl.program_id(1)
    tm = out_ref.shape[-1]

    @pl.when(t == 0)
    def _init():
        acc_ref[...] = jnp.zeros_like(acc_ref)

    @pl.when(nnz_ref[t, s] > 0)
    def _accumulate():
        adj_tile = adj_ref[...].astype(jnp.float32)                     # (T, T)
        # coef[tgt, src] = -adj[tgt, src] * sqdist ; edges <= 0.01 dropped.
        a_base = jnp.where(adj_tile > EDGE_THRESH, -adj_tile, 0.0)      # shared across heads
        sgn = 1.0 - 2.0 * _feat0_mask((1, dout), 1, jnp.float32)        # -1 at feature 0

        def head_body(head, carry):
            h_t = h_tgt_ref[head]                                       # (T, D)
            h_s = h_src_ref[head]                                       # (T, D)
            # Pairwise Minkowski inner products <h_tgt, h_src> (f32 MXU; arcosh near 1 is
            # accuracy-sensitive, so this stays f32).
            prod = lax.dot_general(h_t, h_s * sgn, (((1,), (1,)), ((), ())),
                                   preferred_element_type=jnp.float32)  # (T, T)
            theta = jnp.maximum(prod * (-c), 1.0 + EPS)                 # -prod / K
            sq = jnp.minimum(K * _arcosh_nc(theta) ** 2, SQDIST_CLAMP)  # Hyperboloid.sqdist
            a = a_base * sq                                             # masked coefficients
            # Fused numerator/denominator of the weighted Moebius gyromidpoint: one MXU
            # pass over the attention tile (only D+1 output rows -> MXU is cheap; keep f32).
            nd = lax.dot_general(rhs_ref[head], a, (((1,), (0,)), ((), ())),
                                 preferred_element_type=jnp.float32)    # (D+1, T)
            acc_ref[head] = acc_ref[head] + nd
            return carry

        lax.fori_loop(0, nheads, head_body, 0)

    @pl.when(t == pl.num_programs(1) - 1)
    def _finalize():
        row0 = _feat0_mask((dout, tm), 0, jnp.float32)                  # feature-0 row mask
        tail0 = 1.0 - row0

        def fin_body(head, carry):
            nd = acc_ref[head]                                          # (D+1, T)
            num = nd[:dout, :]                                          # (D, T), row 0 == 0
            # Coefficients are nonpositive (a = -adj*sqdist) and (lam-1) >= 1, so den <= 0:
            # sign-preserving clamp.
            den = jnp.minimum(nd[dout:dout + 1, :], -MIN_NORM)          # (1, T)

            # TODO(synk): GraphZoo's PoincareBall().mobius_midpoint source unavailable; using
            # the standard Ungar gyromidpoint formula (c=1 ball), as in the reference port.
            wv = num / den
            wn = jnp.maximum(jnp.sqrt(jnp.sum(wv * wv, axis=0, keepdims=True)), MIN_NORM)
            mid = jnp.tanh(0.5 * _artanh(wn)) * (wv / wn)               # (D, T), row 0 == 0

            # Hyperboloid().from_poincare
            m_sq = jnp.sum(mid * mid, axis=0, keepdims=True)
            dnm = jnp.maximum(K - m_sq, MIN_NORM)
            emb = (sqrtK * (K + m_sq) / dnm) * row0 + (2.0 * K / dnm) * mid

            if use_act:
                # HypAct(act=ReLU, c_in == c_out), feature-major orientation.
                x0 = emb[0:1, :]
                tail = emb * tail0
                y_norm = jnp.maximum(jnp.sqrt(jnp.sum(tail * tail, axis=0, keepdims=True)),
                                     MIN_NORM)
                theta_a = jnp.maximum(x0 / sqrtK, 1.0 + EPS)
                u = tail * (sqrtK * _arcosh_nc(theta_a) / y_norm)
                u = jnp.maximum(u, 0.0)                                 # ReLU in tangent space
                un = jnp.maximum(jnp.sqrt(jnp.sum(u * u, axis=0, keepdims=True)), MIN_NORM)
                res_tail = sqrtK * _sinh(un / sqrtK) * (u / un)
                y_sq = jnp.sum(res_tail * res_tail, axis=0, keepdims=True)
                emb = jnp.sqrt(jnp.maximum(K + y_sq, EPS)) * row0 + res_tail

            out_ref[head] = emb
            return carry

        lax.fori_loop(0, nheads, fin_body, 0)


def _vmem_limit_bytes(tile, nheads, dout, adj_bytes):
    """O(tile^2) VMEM footprint of one grid step (independent of graph size)."""
    f32 = 4
    io = 2 * tile * tile * adj_bytes                 # adj tile (double-buffered)
    io += 2 * 2 * nheads * tile * dout * f32         # h_tgt + h_src tiles
    io += 2 * nheads * (dout + 1) * tile * f32       # rhs tile
    io += 2 * nheads * dout * tile * f32             # output tile
    io += nheads * (dout + 1) * tile * f32           # accumulator scratch
    temps = 6 * tile * tile * f32                    # adj_f32 / a_base / prod / theta / sq / a
    est = int(1.3 * (io + temps)) + (4 << 20)
    if est > _VMEM_HARD_LIMIT:
        raise ValueError(
            f"tile={tile} needs ~{est >> 20} MiB VMEM; reduce the tile size "
            f"(v7x has 64 MiB per TensorCore).")
    return max(est, 32 * 1024 * 1024)


# ------------------------------------ module wrapper -------------------------------------

def _xavier_uniform(key, shape, fan_in, fan_out):
    bound = (6.0 / (fan_in + fan_out)) ** 0.5
    return jax.random.uniform(key, shape, jnp.float32, -bound, bound)


class MultiHeadGraphAttentionPallas:
    """JAX/Pallas port of MultiHeadGraphAttentionLayer (inference mode: dropout = identity)."""

    def __init__(self, input_dim, output_dim, nheads=1, curvature=1.0, key=None,
                 activation=True, tile=_DEFAULT_TILE, adj_stream_dtype=jnp.bfloat16):
        self.c = float(curvature)
        self.nheads = int(nheads)
        self.input_dim = int(input_dim)
        self.output_dim = int(output_dim)
        self.use_act = bool(activation)
        self.tile = int(tile)
        # bf16 adjacency halves the dominant O(N^2) HBM stream; pass jnp.float32 to keep
        # exact edge-weight semantics for heavily weighted graphs.
        self.adj_stream_dtype = adj_stream_dtype
        k1, k2 = jax.random.split(key)
        # Per-head att_input_linear weights (use_bias=False): (H, out_features, in_features).
        self.w_heads = _xavier_uniform(
            k1, (self.nheads, self.output_dim, self.input_dim),
            fan_in=self.input_dim, fan_out=self.output_dim)
        self.w_out = None
        if self.nheads > 1:
            din = self.nheads * (self.output_dim - 1) + 1
            dall = self.nheads * self.output_dim
            self.w_out = _xavier_uniform(k2, (dall, din), fan_in=din, fan_out=dall)

    def _pick_tile(self, n):
        if n <= _MAX_SINGLE_TILE:
            tile = _round_up(n, 8)               # single grid step on both axes
            return tile, tile
        n_pad = _round_up(n, 128)                # pad by at most 127 nodes
        for cand in (min(self.tile, 1024), 512, 384, 256, 128):
            if cand % 128 == 0 and n_pad % cand == 0:
                return cand, n_pad
        return 128, n_pad

    def __call__(self, x, adj):
        # F.dropout(x, ...) -> identity (inference).
        n = x.shape[0]
        c = self.c
        H, dout = self.nheads, self.output_dim
        K = 1.0 / c
        sqrtK = K ** 0.5

        # Per-head HypLinear + aggregation RHS are O(N*D): precompute in XLA; they are
        # streamed into the kernel as target/source tiles (never fully resident).
        h_all = jax.vmap(lambda w: _hyp_linear(x, w, c))(self.w_heads)      # (H, N, D) f32
        rhs_t = jax.vmap(lambda h: _attention_rhs_t(h, c))(h_all)           # (H, D+1, N) f32

        tile, n_pad = self._pick_tile(n)
        pad = n_pad - n
        adj_p = adj.astype(self.adj_stream_dtype)        # cast fused with the pad pass
        if pad:
            h_all = jnp.pad(h_all, ((0, 0), (0, pad), (0, 0)))
            rhs_t = jnp.pad(rhs_t, ((0, 0), (0, 0), (0, pad)))
            adj_p = jnp.pad(adj_p, ((0, pad), (0, pad)))

        # Per-(tgt_tile, src_tile) edge counts for block-sparsity skipping (SMEM prefetch).
        nb = n_pad // tile
        nnz = jnp.sum((adj_p.astype(jnp.float32) > EDGE_THRESH)
                      .reshape(nb, tile, nb, tile), axis=(1, 3)).astype(jnp.int32)

        grid_spec = pltpu.PrefetchScalarGridSpec(
            num_scalar_prefetch=1,
            grid=(nb, nb),                                   # (src "parallel", tgt "arbitrary")
            in_specs=[
                pl.BlockSpec((tile, tile), lambda s, t, nnz: (t, s)),            # adj[tgt,src]
                pl.BlockSpec((H, tile, dout), lambda s, t, nnz: (0, t, 0)),      # h (tgt tile)
                pl.BlockSpec((H, tile, dout), lambda s, t, nnz: (0, s, 0)),      # h (src tile)
                pl.BlockSpec((H, dout + 1, tile), lambda s, t, nnz: (0, 0, t)),  # rhs (tgt tile)
            ],
            out_specs=pl.BlockSpec((H, dout, tile), lambda s, t, nnz: (0, 0, s)),
            scratch_shapes=[pltpu.VMEM((H, dout + 1, tile), jnp.float32)],
        )
        out = pl.pallas_call(
            functools.partial(_mha_attention_kernel, c=c, dout=dout, nheads=H,
                              use_act=self.use_act),
            out_shape=jax.ShapeDtypeStruct((H, dout, n_pad), jnp.float32),
            grid_spec=grid_spec,
            compiler_params=pltpu.CompilerParams(
                dimension_semantics=("parallel", "arbitrary"),
                vmem_limit_bytes=_vmem_limit_bytes(
                    tile, H, dout, jnp.dtype(self.adj_stream_dtype).itemsize)),
        )(nnz, adj_p, h_all, h_all, rhs_t)                                  # (H, D, N_pad)

        heads = jnp.transpose(out[:, :, :n], (2, 0, 1))                     # (N, H, D)

        # PoincareBall().from_hyperboloid of the stacked head embeddings, concat, back to
        # the hyperboloid, optional linear_out.  O(N*H*D): plain XLA, no tiny pallas_call.
        p = sqrtK * heads[..., 1:] / (heads[..., 0:1] + sqrtK)              # (N, H, D-1)
        p = p.reshape(n, H * (dout - 1))
        # TODO(synk): exact GraphZoo PoincareBall().concat formula unavailable; using plain
        # concatenation followed by a projection back into the Poincare ball.
        norm = jnp.sqrt(jnp.maximum(jnp.sum(p * p, axis=-1, keepdims=True), MIN_NORM))
        maxnorm = (1.0 - 1e-5) / (c ** 0.5)
        p = jnp.where(norm > maxnorm, p / norm * maxnorm, p)
        sqn = jnp.sum(p * p, axis=-1, keepdims=True)
        denom = jnp.maximum(K - sqn, MIN_NORM)
        hcat = jnp.concatenate([sqrtK * (K + sqn) / denom, 2.0 * K * p / denom], axis=-1)

        if self.w_out is not None:
            hcat = _hyp_linear(hcat, self.w_out, c)                         # linear_out
        # final F.dropout -> identity (inference).
        return hcat, adj


# --------------------------------------- demo ---------------------------------------------

if __name__ == "__main__":
    N, DIN, DOUT, H = 8, 8, 8, 2
    C = 1.0

    key = jax.random.PRNGKey(0)
    k_x, k_adj, k_w = jax.random.split(key, 3)

    # Valid hyperboloid input points: random tangent vectors (col 0 = 0) mapped via expmap0.
    tan = 0.5 * jax.random.normal(k_x, (N, DIN), jnp.float32)
    tan = tan * (1.0 - _feat0_mask(tan.shape, 1, tan.dtype))
    x = _hyp_expmap0_proj(tan, C)

    # Dense adjacency with self loops so every node has at least one incoming edge.
    adj = (jax.random.uniform(k_adj, (N, N)) < 0.4).astype(jnp.float32)
    adj = jnp.maximum(adj, jnp.eye(N, dtype=jnp.float32))

    layer = MultiHeadGraphAttentionPallas(DIN, DOUT, nheads=H, curvature=C, key=k_w,
                                          activation=True)
    h, adj_out = layer(x, adj)
    h = jax.block_until_ready(h)

    assert h.shape == (N, H * DOUT), h.shape
    assert bool(jnp.all(jnp.isfinite(h)))
    print("KERNEL_OK")
</pallas_src>

<mosaic_0001>
module attributes {stable_mosaic.version = 11 : i64} {
  func.func @_mha_attention_kernel(%arg0: i32, %arg1: i32, %arg2: memref<1x1xi32, #tpu.memory_space<smem>>, %arg3: memref<8x8xbf16, #tpu.memory_space<vmem>>, %arg4: memref<2x8x8xf32, #tpu.memory_space<vmem>>, %arg5: memref<2x8x8xf32, #tpu.memory_space<vmem>>, %arg6: memref<2x9x8xf32, #tpu.memory_space<vmem>>, %arg7: memref<2x8x8xf32, #tpu.memory_space<vmem>>, %arg8: memref<2x9x8xf32, #tpu.memory_space<vmem>>) attributes {dimension_semantics = [#tpu.dimension_semantics<parallel>, #tpu.dimension_semantics<arbitrary>], iteration_bounds = array<i64: 1, 1>, scalar_prefetch = 1 : i64, scratch_operands = 1 : i64, tpu.core_type = #tpu.core_type<tc>, window_params = [{transform_indices = @transform_0, window_bounds = array<i64: 8, 8>}, {transform_indices = @transform_1, window_bounds = array<i64: 2, 8, 8>}, {transform_indices = @transform_2, window_bounds = array<i64: 2, 8, 8>}, {transform_indices = @transform_3, window_bounds = array<i64: 2, 9, 8>}, {transform_indices = @transform_4, window_bounds = array<i64: 2, 8, 8>}]} {
    %c0_i32 = arith.constant 0 : i32
    %0 = arith.cmpi eq, %arg1, %c0_i32 : i32
    %1 = arith.extui %0 : i1 to i32
    %c0_i32_0 = arith.constant 0 : i32
    %2 = arith.cmpi ne, %1, %c0_i32_0 : i32
    scf.if %2 {
      %cst = arith.constant 0.000000e+00 : f32
      %12 = vector.broadcast %cst : f32 to vector<2x9x8xf32>
      %c0 = arith.constant 0 : index
      %c0_5 = arith.constant 0 : index
      %c0_6 = arith.constant 0 : index
      %13 = vector.load %arg8[%c0, %c0_5, %c0_6] : memref<2x9x8xf32, #tpu.memory_space<vmem>>, vector<2x9x8xf32>
      tpu.vector_store %arg8[%c0, %c0_5, %c0_6], %12 {strides = array<i32>} : memref<2x9x8xf32, #tpu.memory_space<vmem>>, vector<2x9x8xf32>,
    } else {
    }
    %3 = arith.index_cast %arg1 : i32 to index
    %4 = arith.index_cast %arg0 : i32 to index
    %5 = memref.load %arg2[%3, %4] : memref<1x1xi32, #tpu.memory_space<smem>>
    %c0_i32_1 = arith.constant 0 : i32
    %6 = arith.cmpi sgt, %5, %c0_i32_1 : i32
    %7 = arith.extui %6 : i1 to i32
    %c0_i32_2 = arith.constant 0 : i32
    %8 = arith.cmpi ne, %7, %c0_i32_2 : i32
    scf.if %8 {
      %c0 = arith.constant 0 : index
      %c0_5 = arith.constant 0 : index
      %12 = vector.load %arg3[%c0, %c0_5] : memref<8x8xbf16, #tpu.memory_space<vmem>>, vector<8x8xbf16>
      %13 = arith.extf %12 : vector<8x8xbf16> to vector<8x8xf32>
      %cst = arith.constant 0.00999999977 : f32
      %14 = vector.broadcast %cst : f32 to vector<8x8xf32>
      %15 = arith.cmpf ogt, %13, %14 : vector<8x8xf32>
      %cst_6 = arith.constant 0.000000e+00 : f32
      %16 = vector.broadcast %cst_6 : f32 to vector<8x8xf32>
      %17 = arith.subf %16, %13 : vector<8x8xf32>
      %cst_7 = arith.constant 0.000000e+00 : f32
      %18 = vector.broadcast %cst_7 : f32 to vector<8x8xf32>
      %19 = arith.select %15, %17, %18 : vector<8x8xi1>, vector<8x8xf32>
      %20 = tpu.iota {dimensions = array<i32: 1>} : vector<1x8xi32>
      %c0_i32_8 = arith.constant 0 : i32
      %21 = vector.broadcast %c0_i32_8 : i32 to vector<1x8xi32>
      %22 = arith.cmpi eq, %20, %21 : vector<1x8xi32>
      %23 = arith.extui %22 : vector<1x8xi1> to vector<1x8xi32>
      %24 = arith.sitofp %23 : vector<1x8xi32> to vector<1x8xf32>
      %cst_9 = arith.constant 2.000000e+00 : f32
      %25 = vector.broadcast %cst_9 : f32 to vector<1x8xf32>
      %26 = arith.mulf %25, %24 : vector<1x8xf32>
      %cst_10 = arith.constant 1.000000e+00 : f32
      %27 = vector.broadcast %cst_10 : f32 to vector<1x8xf32>
      %28 = arith.subf %27, %26 : vector<1x8xf32>
      %c0_i32_11 = arith.constant 0 : i32
      %c2_i32 = arith.constant 2 : i32
      %29 = arith.addi %c0_i32_11, %c2_i32 : i32
      %c1_i32 = arith.constant 1 : i32
      scf.for %arg9 = %c0_i32_11 to %29 step %c1_i32  : i32 {
        %30 = arith.index_cast %arg9 : i32 to index
        %c0_13 = arith.constant 0 : index
        %c0_14 = arith.constant 0 : index
        %31 = vector.load %arg4[%30, %c0_13, %c0_14] : memref<2x8x8xf32, #tpu.memory_space<vmem>>, vector<1x8x8xf32>
        %32 = vector.shape_cast %31 : vector<1x8x8xf32> to vector<8x8xf32>
        %33 = arith.index_cast %arg9 : i32 to index
        %c0_15 = arith.constant 0 : index
        %c0_16 = arith.constant 0 : index
        %34 = vector.load %arg5[%33, %c0_15, %c0_16] : memref<2x8x8xf32, #tpu.memory_space<vmem>>, vector<1x8x8xf32>
        %35 = vector.shape_cast %34 : vector<1x8x8xf32> to vector<8x8xf32>
        %36 = vector.broadcast %28 : vector<1x8xf32> to vector<8x8xf32>
        %37 = arith.mulf %35, %36 : vector<8x8xf32>
        %cst_17 = arith.constant dense<0.000000e+00> : vector<8x8xf32>
        %38 = tpu.matmul %32, %37, %cst_17 {dimension_numbers = #tpu.dot_dimension_numbers<[1], [1], [0], [0], [0, 0, 1, 0], [], []>} : vector<8x8xf32>, vector<8x8xf32>, vector<8x8xf32> -> vector<8x8xf32>
        %cst_18 = arith.constant -1.000000e+00 : f32
        %39 = vector.broadcast %cst_18 : f32 to vector<8x8xf32>
        %40 = arith.mulf %38, %39 : vector<8x8xf32>
        %cst_19 = arith.constant 1.00000012 : f32
        %41 = vector.broadcast %cst_19 : f32 to vector<8x8xf32>
        %42 = arith.maximumf %40, %41 : vector<8x8xf32>
        %43 = arith.mulf %42, %42 : vector<8x8xf32>
        %cst_20 = arith.constant 1.000000e+00 : f32
        %44 = vector.broadcast %cst_20 : f32 to vector<8x8xf32>
        %45 = arith.subf %43, %44 : vector<8x8xf32>
        %46 = math.sqrt %45 : vector<8x8xf32>
        %47 = arith.addf %42, %46 : vector<8x8xf32>
        %48 = math.log %47 : vector<8x8xf32>
        %49 = arith.mulf %48, %48 : vector<8x8xf32>
        %cst_21 = arith.constant 1.000000e+00 : f32
        %50 = vector.broadcast %cst_21 : f32 to vector<8x8xf32>
        %51 = arith.mulf %50, %49 : vector<8x8xf32>
        %cst_22 = arith.constant 5.000000e+01 : f32
        %52 = vector.broadcast %cst_22 : f32 to vector<8x8xf32>
        %53 = arith.minimumf %51, %52 : vector<8x8xf32>
        %54 = arith.mulf %19, %53 : vector<8x8xf32>
        %55 = arith.index_cast %arg9 : i32 to index
        %c0_23 = arith.constant 0 : index
        %c0_24 = arith.constant 0 : index
        %56 = vector.load %arg6[%55, %c0_23, %c0_24] : memref<2x9x8xf32, #tpu.memory_space<vmem>>, vector<1x9x8xf32>
        %57 = vector.shape_cast %56 : vector<1x9x8xf32> to vector<9x8xf32>
        %cst_25 = arith.constant dense<0.000000e+00> : vector<9x8xf32>
        %58 = tpu.matmul %57, %54, %cst_25 {dimension_numbers = #tpu.dot_dimension_numbers<[1], [0], [0], [1], [0, 0, 1, 1], [], []>} : vector<9x8xf32>, vector<8x8xf32>, vector<9x8xf32> -> vector<9x8xf32>
        %59 = arith.index_cast %arg9 : i32 to index
        %c0_26 = arith.constant 0 : index
        %c0_27 = arith.constant 0 : index
        %60 = vector.load %arg8[%59, %c0_26, %c0_27] : memref<2x9x8xf32, #tpu.memory_space<vmem>>, vector<1x9x8xf32>
        %61 = vector.shape_cast %60 : vector<1x9x8xf32> to vector<9x8xf32>
        %62 = arith.addf %61, %58 : vector<9x8xf32>
        %63 = arith.index_cast %arg9 : i32 to index
        %c0_28 = arith.constant 0 : index
        %c0_29 = arith.constant 0 : index
        %64 = vector.load %arg8[%63, %c0_28, %c0_29] : memref<2x9x8xf32, #tpu.memory_space<vmem>>, vector<1x9x8xf32>
        %65 = vector.shape_cast %64 : vector<1x9x8xf32> to vector<9x8xf32>
        %66 = vector.shape_cast %62 : vector<9x8xf32> to vector<1x9x8xf32>
        tpu.vector_store %arg8[%63, %c0_28, %c0_29], %66 {strides = array<i32>} : memref<2x9x8xf32, #tpu.memory_space<vmem>>, vector<1x9x8xf32>,
      }
      %c2_i32_12 = arith.constant 2 : i32
    } else {
    }
    %c0_i32_3 = arith.constant 0 : i32
    %9 = arith.cmpi eq, %arg1, %c0_i32_3 : i32
    %10 = arith.extui %9 : i1 to i32
    %c0_i32_4 = arith.constant 0 : i32
    %11 = arith.cmpi ne, %10, %c0_i32_4 : i32
    scf.if %11 {
      %12 = tpu.iota {dimensions = array<i32: 0>} : vector<8x8xi32>
      %c0_i32_5 = arith.constant 0 : i32
      %13 = vector.broadcast %c0_i32_5 : i32 to vector<8x8xi32>
      %14 = arith.cmpi eq, %12, %13 : vector<8x8xi32>
      %15 = arith.extui %14 : vector<8x8xi1> to vector<8x8xi32>
      %16 = arith.sitofp %15 : vector<8x8xi32> to vector<8x8xf32>
      %cst = arith.constant 1.000000e+00 : f32
      %17 = vector.broadcast %cst : f32 to vector<8x8xf32>
      %18 = arith.subf %17, %16 : vector<8x8xf32>
      %c0_i32_6 = arith.constant 0 : i32
      %c2_i32 = arith.constant 2 : i32
      %19 = arith.addi %c0_i32_6, %c2_i32 : i32
      %c1_i32 = arith.constant 1 : i32
      scf.for %arg9 = %c0_i32_6 to %19 step %c1_i32  : i32 {
        %20 = arith.index_cast %arg9 : i32 to index
        %c0 = arith.constant 0 : index
        %c0_8 = arith.constant 0 : index
        %21 = vector.load %arg8[%20, %c0, %c0_8] : memref<2x9x8xf32, #tpu.memory_space<vmem>>, vector<1x9x8xf32>
        %22 = vector.shape_cast %21 : vector<1x9x8xf32> to vector<9x8xf32>
        %23 = vector.extract_strided_slice %22 {offsets = [0, 0], sizes = [8, 8], strides = [1, 1]} : vector<9x8xf32> to vector<8x8xf32>
        %24 = vector.extract_strided_slice %22 {offsets = [8, 0], sizes = [1, 8], strides = [1, 1]} : vector<9x8xf32> to vector<1x8xf32>
        %cst_9 = arith.constant -1.000000e-15 : f32
        %25 = vector.broadcast %cst_9 : f32 to vector<1x8xf32>
        %26 = arith.minimumf %24, %25 : vector<1x8xf32>
        %27 = vector.broadcast %26 : vector<1x8xf32> to vector<8x8xf32>
        %28 = arith.divf %23, %27 : vector<8x8xf32>
        %29 = arith.mulf %28, %28 : vector<8x8xf32>
        %cst_10 = arith.constant dense<0.000000e+00> : vector<8xf32>
        %30 = vector.multi_reduction <add>, %29, %cst_10 [0] : vector<8x8xf32> to vector<8xf32>
        %31 = vector.shape_cast %30 : vector<8xf32> to vector<1x8xf32>
        %32 = math.sqrt %31 : vector<1x8xf32>
        %cst_11 = arith.constant 1.000000e-15 : f32
        %33 = vector.broadcast %cst_11 : f32 to vector<1x8xf32>
        %34 = arith.maximumf %32, %33 : vector<1x8xf32>
        %cst_12 = arith.constant -0.99999988 : f32
        %cst_13 = arith.constant 0.99999988 : f32
        %35 = vector.broadcast %cst_12 : f32 to vector<1x8xf32>
        %36 = arith.maximumf %35, %34 : vector<1x8xf32>
        %37 = vector.broadcast %cst_13 : f32 to vector<1x8xf32>
        %38 = arith.minimumf %37, %36 : vector<1x8xf32>
        %cst_14 = arith.constant 1.000000e+00 : f32
        %39 = vector.broadcast %cst_14 : f32 to vector<1x8xf32>
        %40 = arith.addf %39, %38 : vector<1x8xf32>
        %cst_15 = arith.constant 1.000000e+00 : f32
        %41 = vector.broadcast %cst_15 : f32 to vector<1x8xf32>
        %42 = arith.subf %41, %38 : vector<1x8xf32>
        %43 = arith.divf %40, %42 : vector<1x8xf32>
        %44 = math.log %43 : vector<1x8xf32>
        %cst_16 = arith.constant 5.000000e-01 : f32
        %45 = vector.broadcast %cst_16 : f32 to vector<1x8xf32>
        %46 = arith.mulf %45, %44 : vector<1x8xf32>
        %cst_17 = arith.constant 5.000000e-01 : f32
        %47 = vector.broadcast %cst_17 : f32 to vector<1x8xf32>
        %48 = arith.mulf %47, %46 : vector<1x8xf32>
        %49 = math.tanh %48 : vector<1x8xf32>
        %50 = vector.broadcast %34 : vector<1x8xf32> to vector<8x8xf32>
        %51 = arith.divf %28, %50 : vector<8x8xf32>
        %52 = vector.broadcast %49 : vector<1x8xf32> to vector<8x8xf32>
        %53 = arith.mulf %52, %51 : vector<8x8xf32>
        %54 = arith.mulf %53, %53 : vector<8x8xf32>
        %cst_18 = arith.constant dense<0.000000e+00> : vector<8xf32>
        %55 = vector.multi_reduction <add>, %54, %cst_18 [0] : vector<8x8xf32> to vector<8xf32>
        %56 = vector.shape_cast %55 : vector<8xf32> to vector<1x8xf32>
        %cst_19 = arith.constant 1.000000e+00 : f32
        %57 = vector.broadcast %cst_19 : f32 to vector<1x8xf32>
        %58 = arith.subf %57, %56 : vector<1x8xf32>
        %cst_20 = arith.constant 1.000000e-15 : f32
        %59 = vector.broadcast %cst_20 : f32 to vector<1x8xf32>
        %60 = arith.maximumf %58, %59 : vector<1x8xf32>
        %cst_21 = arith.constant 1.000000e+00 : f32
        %61 = vector.broadcast %cst_21 : f32 to vector<1x8xf32>
        %62 = arith.addf %61, %56 : vector<1x8xf32>
        %cst_22 = arith.constant 1.000000e+00 : f32
        %63 = vector.broadcast %cst_22 : f32 to vector<1x8xf32>
        %64 = arith.mulf %63, %62 : vector<1x8xf32>
        %65 = arith.divf %64, %60 : vector<1x8xf32>
        %66 = vector.broadcast %65 : vector<1x8xf32> to vector<8x8xf32>
        %67 = arith.mulf %66, %16 : vector<8x8xf32>
        %cst_23 = arith.constant 2.000000e+00 : f32
        %68 = vector.broadcast %cst_23 : f32 to vector<1x8xf32>
        %69 = arith.divf %68, %60 : vector<1x8xf32>
        %70 = vector.broadcast %69 : vector<1x8xf32> to vector<8x8xf32>
        %71 = arith.mulf %70, %53 : vector<8x8xf32>
        %72 = arith.addf %67, %71 : vector<8x8xf32>
        %73 = vector.extract_strided_slice %72 {offsets = [0, 0], sizes = [1, 8], strides = [1, 1]} : vector<8x8xf32> to vector<1x8xf32>
        %74 = arith.mulf %72, %18 : vector<8x8xf32>
        %75 = arith.mulf %74, %74 : vector<8x8xf32>
        %cst_24 = arith.constant dense<0.000000e+00> : vector<8xf32>
        %76 = vector.multi_reduction <add>, %75, %cst_24 [0] : vector<8x8xf32> to vector<8xf32>
        %77 = vector.shape_cast %76 : vector<8xf32> to vector<1x8xf32>
        %78 = math.sqrt %77 : vector<1x8xf32>
        %cst_25 = arith.constant 1.000000e-15 : f32
        %79 = vector.broadcast %cst_25 : f32 to vector<1x8xf32>
        %80 = arith.maximumf %78, %79 : vector<1x8xf32>
        %cst_26 = arith.constant 1.000000e+00 : f32
        %81 = vector.broadcast %cst_26 : f32 to vector<1x8xf32>
        %82 = arith.divf %73, %81 : vector<1x8xf32>
        %cst_27 = arith.constant 1.00000012 : f32
        %83 = vector.broadcast %cst_27 : f32 to vector<1x8xf32>
        %84 = arith.maximumf %82, %83 : vector<1x8xf32>
        %85 = arith.mulf %84, %84 : vector<1x8xf32>
        %cst_28 = arith.constant 1.000000e+00 : f32
        %86 = vector.broadcast %cst_28 : f32 to vector<1x8xf32>
        %87 = arith.subf %85, %86 : vector<1x8xf32>
        %88 = math.sqrt %87 : vector<1x8xf32>
        %89 = arith.addf %84, %88 : vector<1x8xf32>
        %90 = math.log %89 : vector<1x8xf32>
        %cst_29 = arith.constant 1.000000e+00 : f32
        %91 = vector.broadcast %cst_29 : f32 to vector<1x8xf32>
        %92 = arith.mulf %91, %90 : vector<1x8xf32>
        %93 = arith.divf %92, %80 : vector<1x8xf32>
        %94 = vector.broadcast %93 : vector<1x8xf32> to vector<8x8xf32>
        %95 = arith.mulf %74, %94 : vector<8x8xf32>
        %cst_30 = arith.constant 0.000000e+00 : f32
        %96 = vector.broadcast %cst_30 : f32 to vector<8x8xf32>
        %97 = arith.maximumf %95, %96 : vector<8x8xf32>
        %98 = arith.mulf %97, %97 : vector<8x8xf32>
        %cst_31 = arith.constant dense<0.000000e+00> : vector<8xf32>
        %99 = vector.multi_reduction <add>, %98, %cst_31 [0] : vector<8x8xf32> to vector<8xf32>
        %100 = vector.shape_cast %99 : vector<8xf32> to vector<1x8xf32>
        %101 = math.sqrt %100 : vector<1x8xf32>
        %cst_32 = arith.constant 1.000000e-15 : f32
        %102 = vector.broadcast %cst_32 : f32 to vector<1x8xf32>
        %103 = arith.maximumf %101, %102 : vector<1x8xf32>
        %cst_33 = arith.constant 1.000000e+00 : f32
        %104 = vector.broadcast %cst_33 : f32 to vector<1x8xf32>
        %105 = arith.divf %103, %104 : vector<1x8xf32>
        %cst_34 = arith.constant -1.500000e+01 : f32
        %cst_35 = arith.constant 1.500000e+01 : f32
        %106 = vector.broadcast %cst_34 : f32 to vector<1x8xf32>
        %107 = arith.maximumf %106, %105 : vector<1x8xf32>
        %108 = vector.broadcast %cst_35 : f32 to vector<1x8xf32>
        %109 = arith.minimumf %108, %107 : vector<1x8xf32>
        %110 = math.exp %109 : vector<1x8xf32>
        %cst_36 = arith.constant 0.000000e+00 : f32
        %111 = vector.broadcast %cst_36 : f32 to vector<1x8xf32>
        %112 = arith.subf %111, %109 : vector<1x8xf32>
        %113 = math.exp %112 : vector<1x8xf32>
        %114 = arith.subf %110, %113 : vector<1x8xf32>
        %cst_37 = arith.constant 5.000000e-01 : f32
        %115 = vector.broadcast %cst_37 : f32 to vector<1x8xf32>
        %116 = arith.mulf %115, %114 : vector<1x8xf32>
        %cst_38 = arith.constant 1.000000e+00 : f32
        %117 = vector.broadcast %cst_38 : f32 to vector<1x8xf32>
        %118 = arith.mulf %117, %116 : vector<1x8xf32>
        %119 = vector.broadcast %103 : vector<1x8xf32> to vector<8x8xf32>
        %120 = arith.divf %97, %119 : vector<8x8xf32>
        %121 = vector.broadcast %118 : vector<1x8xf32> to vector<8x8xf32>
        %122 = arith.mulf %121, %120 : vector<8x8xf32>
        %123 = arith.mulf %122, %122 : vector<8x8xf32>
        %cst_39 = arith.constant dense<0.000000e+00> : vector<8xf32>
        %124 = vector.multi_reduction <add>, %123, %cst_39 [0] : vector<8x8xf32> to vector<8xf32>
        %125 = vector.shape_cast %124 : vector<8xf32> to vector<1x8xf32>
        %cst_40 = arith.constant 1.000000e+00 : f32
        %126 = vector.broadcast %cst_40 : f32 to vector<1x8xf32>
        %127 = arith.addf %126, %125 : vector<1x8xf32>
        %cst_41 = arith.constant 1.000000e-07 : f32
        %128 = vector.broadcast %cst_41 : f32 to vector<1x8xf32>
        %129 = arith.maximumf %127, %128 : vector<1x8xf32>
        %130 = math.sqrt %129 : vector<1x8xf32>
        %131 = vector.broadcast %130 : vector<1x8xf32> to vector<8x8xf32>
        %132 = arith.mulf %131, %16 : vector<8x8xf32>
        %133 = arith.addf %132, %122 : vector<8x8xf32>
        %134 = arith.index_cast %arg9 : i32 to index
        %c0_42 = arith.constant 0 : index
        %c0_43 = arith.constant 0 : index
        %135 = vector.load %arg7[%134, %c0_42, %c0_43] : memref<2x8x8xf32, #tpu.memory_space<vmem>>, vector<1x8x8xf32>
        %136 = vector.shape_cast %135 : vector<1x8x8xf32> to vector<8x8xf32>
        %137 = vector.shape_cast %133 : vector<8x8xf32> to vector<1x8x8xf32>
        tpu.vector_store %arg7[%134, %c0_42, %c0_43], %137 {strides = array<i32>} : memref<2x8x8xf32, #tpu.memory_space<vmem>>, vector<1x8x8xf32>,
      }
      %c2_i32_7 = arith.constant 2 : i32
    } else {
    }
    return
  }
  func.func @transform_0(%arg0: i32, %arg1: i32, %arg2: memref<1x1xi32, #tpu.memory_space<smem>>) -> (i32, i32) {
    %c0_i32 = arith.constant 0 : i32
    return %arg1, %arg0 : i32, i32
  }
  func.func @transform_1(%arg0: i32, %arg1: i32, %arg2: memref<1x1xi32, #tpu.memory_space<smem>>) -> (i32, i32, i32) {
    %c0_i32 = arith.constant 0 : i32
    %c0_i32_0 = arith.constant 0 : i32
    %c0_i32_1 = arith.constant 0 : i32
    return %c0_i32, %arg1, %c0_i32_0 : i32, i32, i32
  }
  func.func @transform_2(%arg0: i32, %arg1: i32, %arg2: memref<1x1xi32, #tpu.memory_space<smem>>) -> (i32, i32, i32) {
    %c0_i32 = arith.constant 0 : i32
    %c0_i32_0 = arith.constant 0 : i32
    %c0_i32_1 = arith.constant 0 : i32
    return %c0_i32, %arg0, %c0_i32_0 : i32, i32, i32
  }
  func.func @transform_3(%arg0: i32, %arg1: i32, %arg2: memref<1x1xi32, #tpu.memory_space<smem>>) -> (i32, i32, i32) {
    %c0_i32 = arith.constant 0 : i32
    %c0_i32_0 = arith.constant 0 : i32
    %c0_i32_1 = arith.constant 0 : i32
    return %c0_i32, %c0_i32_0, %arg1 : i32, i32, i32
  }
  func.func @transform_4(%arg0: i32, %arg1: i32, %arg2: memref<1x1xi32, #tpu.memory_space<smem>>) -> (i32, i32, i32) {
    %c0_i32 = arith.constant 0 : i32
    %c0_i32_0 = arith.constant 0 : i32
    %c0_i32_1 = arith.constant 0 : i32
    return %c0_i32, %c0_i32_0, %arg0 : i32, i32, i32
  }
}

</mosaic_0001>

<llo_original>
// kernel: tpu_custom_call.1
$region0: #{tpu_custom_call.1}
  #allocation0 [shape = 'u32[]', space=smem, size = 0x4, offset = 0x4, fixed_abs, tag = 'smem constant byte address 0x4 - core index']
  #allocation1 [shape = 'u32[144,128]{1,0:T(1,128)}', space=vmem, size = 0x12000, scoped, tag = 'internal scratch']
  #allocation2 [shape = 'f32[2,9,8]{2,1,0:T(8,128)}', space=vmem, size = 0x4000, scoped, tag = 'scratch operand']
  #allocation3 [shape = 's32[1]{0}', space=sflag, size = 0x4, scoped, tag = 'scoped memory for tpu_custom_call.1']
  #allocation4 [shape = 's32[1,1]{1,0:T(1,128)S(6)}', space=smem, size = 0x200, scoped, tag = 'prefetched SMEM operand 0']
  %s0 = inlined_call_operand.<no memory space> [shape: s32[1,1], index: 0, kind: input, shape index: {}]
  %s1 = inlined_call_operand.vmem [shape: bf16[8,8], index: 1, kind: input, shape index: {}]
  %s2 = inlined_call_operand.vmem [shape: f32[2,8,8], index: 2, kind: input, shape index: {}]
  %s3 = inlined_call_operand.vmem [shape: f32[2,8,8], index: 3, kind: input, shape index: {}]
  %s4 = inlined_call_operand.vmem [shape: f32[2,9,8], index: 4, kind: input, shape index: {}]
  %s5 = inlined_call_operand.hbm [shape: f32[2,8,8], index: 5, kind: output, shape index: {}]
  %s6 = sld [smem:[#allocation0]]
  $region52: #{tpu_custom_call.1} parent=0
    _
  %s8 = ssub.s32 1, %s6
  %s9 = scalar_select 0, %s8, %s6
  %10 = sst [smem:[#allocation4]] %s0
  $region1: #{tpu_custom_call.1} parent=0
    #allocation5 [shape = 'u8[8192]{0}', space=vmem, size = 0x2000, scoped, tag = 'output window, operand 0, single buffered']
    #allocation6 [shape = 's32[1]{0}', space=sflag, size = 0x4, scoped, tag = 'scoped memory for tpu_custom_call.1']
    %11 = vsyncpa [#allocation6], 0
    // Predicated region
    $region2: #{tpu_custom_call.1} parent=1 // pred_check
      _
    $region3: #{tpu_custom_call.1} parent=1 // pred_check_branch
      %13 = sbr.rel (0) target = $region5
    $region4: #{tpu_custom_call.1} parent=1 // pred_region
      _
    $region5: #{tpu_custom_call.1} parent=1 // pred_fallthru
      _
    // Predicated region
    $region6: #{tpu_custom_call.1} parent=1 // pred_check
      _
    $region7: #{tpu_custom_call.1} parent=1 // pred_check_branch
      %15 = sbr.rel (0) target = $region9
    $region8: #{tpu_custom_call.1} parent=1 // pred_region
      _
    $region9: #{tpu_custom_call.1} parent=1 // pred_fallthru
      _
    // Predicated region
    $region10: #{tpu_custom_call.1} parent=1 // pred_check
      _
    $region11: #{tpu_custom_call.1} parent=1 // pred_check_branch
      %17 = sbr.rel (0) target = $region13
    $region12: #{tpu_custom_call.1} parent=1 // pred_region
      _
    $region13: #{tpu_custom_call.1} parent=1 // pred_fallthru
      _
    // Predicated region
    $region14: #{tpu_custom_call.1} parent=1 // pred_check
      _
    $region15: #{tpu_custom_call.1} parent=1 // pred_check_branch
      %19 = sbr.rel (0) target = $region17
    $region16: #{tpu_custom_call.1} parent=1 // pred_region
      _
    $region17: #{tpu_custom_call.1} parent=1 // pred_fallthru
      _
    %p20 = scmp.eq.s32.totalorder 0, 0
    // Predicated region
    $region18: #{tpu_custom_call.1} parent=1 // pred_check
      %p21 = pneg %p20
    $region19: #{tpu_custom_call.1} parent=1 // pred_check_branch
      %23 = sbr.rel (%p21) target = $region21
    $region20: #{tpu_custom_call.1} parent=1 // pred_region
      %vm24 = vcmask 64512
      %25 = vst.msk [vmem:[#allocation2] sm:$0xff] %vm24, 0.0
      %vm26 = vcmask 57344
      %27 = vst.msk [vmem:[#allocation2 + $0x8] sm:$0x1] %vm26, 0.0
      %28 = vst.msk [vmem:[#allocation2 + $0x10] sm:$0xff] %vm24, 0.0
      %29 = vst.msk [vmem:[#allocation2 + $0x18] sm:$0x1] %vm26, 0.0
    $region21: #{tpu_custom_call.1} parent=1 // pred_fallthru
      _
    %s30 = sadd.s32 0, 0
    %s31 = smul.u32 %s30, 128
    %s32 = sadd.s32 %s31, 0
    %s33 = sld [smem:[#allocation4 + %s32]]
    %p34 = scmp.gt.s32.totalorder %s33, 0
    // Predicated region
    $region22: #{tpu_custom_call.1} parent=1 // pred_check
      %p35 = pneg %p34
    $region23: #{tpu_custom_call.1} parent=1 // pred_check_branch
      %37 = sbr.rel (%p35) target = $region25
    $region24: #{tpu_custom_call.1} parent=1 // pred_region
      %v38 = vld [vmem:[%s1] sm:$0xf]
      %v39 = vunpack.c.l.bf16 %v38
      %vm40 = vcmp.gt.f32.partialorder %v39, 0.01
      %v41 = vsub.f32 0.0, %v39
      %v42 = vsel %vm40, %v41, 0.0
      %v43 = vlaneseq
      %v44 = vand.u32 %v43, 127
      %vm45 = vcmp.eq.s32.totalorder %v44, 0
      %v46 = vsel %vm45, 1, 0
      %v47 = vcvt.s32.f32 %v46
      %v48 = vmul.f32 %v47, 2.0
      %v49 = vsub.f32 1.0, %v48
      loop: start=0, step=1, limit=2
      $region26: #{tpu_custom_call.1} parent=24 // loop_pre_header
        _
      $region27: #{tpu_custom_call.1} parent=24 // loop_header
        %s51 = sphi 0, %s55
        %p52 = scmp.ge.s32.totalorder %s51, 2
      $region28: #{tpu_custom_call.1} parent=24 // loop_header_branch
        %54 = sbr.rel (%p52) target = $region32
      $region29: #{tpu_custom_call.1} parent=24 // loop_body
        %s56 = smul.u32 %s51, 8
        %s57 = scalar_lea.vmem %s2, %s56
        %v58 = vld [vmem:[%s57] sm:$0xff]
        %s59 = scalar_lea.vmem %s3, %s56
        %v60 = vld [vmem:[%s59] sm:$0xff]
        %v61 = vmul.f32 %v60, %v49
        %vm62 = vcmask 64512
        %v64 = vsel %vm62, %v58, 0
        %v67 = vsel %vm62, %v61, 0
        %69 = vmatprep.subr.mxu0 0.0
        %70 = vmatpush1.xpose.msra.mxu0 %v67
        %71 = vmatprep.subr.mxu0 0.0
        %72 = vmatpush1.xpose.msra.mxu0 0.0
        %73 = vmatprep.subr.mxu0 0.0
        %74 = vmatpush1.xpose.msra.mxu0 0.0
        %75 = vmatprep.subr.mxu0 0.0
        %76 = vmatpush1.xpose.msra.mxu0 0.0
        %77 = vmatprep.subr.mxu0 0.0
        %78 = vmatpush1.xpose.msra.mxu0 0.0
        %79 = vmatprep.subr.mxu0 0.0
        %80 = vmatpush1.xpose.msra.mxu0 0.0
        %81 = vmatprep.subr.mxu0 0.0
        %82 = vmatpush1.xpose.msra.mxu0 0.0
        %83 = vmatprep.subr.mxu0 0.0
        %84 = vmatpush1.xpose.msra.mxu0 0.0
        %85 = vmatprep.subr.mxu0 0.0
        %86 = vmatpush1.xpose.msra.mxu0 0.0
        %87 = vmatprep.subr.mxu0 0.0
        %88 = vmatpush1.xpose.msra.mxu0 0.0
        %89 = vmatprep.subr.mxu0 0.0
        %90 = vmatpush1.xpose.msra.mxu0 0.0
        %91 = vmatprep.subr.mxu0 0.0
        %92 = vmatpush1.xpose.msra.mxu0 0.0
        %93 = vmatprep.subr.mxu0 0.0
        %94 = vmatpush1.xpose.msra.mxu0 0.0
        %95 = vmatprep.subr.mxu0 0.0
        %96 = vmatpush1.xpose.msra.mxu0 0.0
        %97 = vmatprep.subr.mxu0 0.0
        %98 = vmatpush1.xpose.msra.mxu0 0.0
        %99 = vmatprep.subr.mxu0 0.0
        %100 = vmatpush1.xpose.msra.mxu0 0.0
        %101 = vmatprep.subr.mxu0 0.0
        %102 = vmatpush1.xpose.msra.mxu0 0.0
        %103 = vmatprep.subr.mxu0 0.0
        %104 = vmatpush1.xpose.msra.mxu0 0.0
        %105 = vmatprep.subr.mxu0 0.0
        %106 = vmatpush1.xpose.msra.mxu0 0.0
        %107 = vmatprep.subr.mxu0 0.0
        %108 = vmatpush1.xpose.msra.mxu0 0.0
        %109 = vmatprep.subr.mxu0 0.0
        %110 = vmatpush1.xpose.msra.mxu0 0.0
        %111 = vmatprep.subr.mxu0 0.0
        %112 = vmatpush1.xpose.msra.mxu0 0.0
        %113 = vmatprep.subr.mxu0 0.0
        %114 = vmatpush1.xpose.msra.mxu0 0.0
        %115 = vmatprep.subr.mxu0 0.0
        %116 = vmatpush1.xpose.msra.mxu0 0.0
        %117 = vmatprep.subr.mxu0 0.0
        %118 = vmatpush1.xpose.msra.mxu0 0.0
        %119 = vmatprep.subr.mxu0 0.0
        %120 = vmatpush1.xpose.msra.mxu0 0.0
        %121 = vmatprep.subr.mxu0 0.0
        %122 = vmatpush1.xpose.msra.mxu0 0.0
        %123 = vmatprep.subr.mxu0 0.0
        %124 = vmatpush1.xpose.msra.mxu0 0.0
        %125 = vmatprep.subr.mxu0 0.0
        %126 = vmatpush1.xpose.msra.mxu0 0.0
        %127 = vmatprep.subr.mxu0 0.0
        %128 = vmatpush1.xpose.msra.mxu0 0.0
        %129 = vmatprep.subr.mxu0 0.0
        %130 = vmatpush1.xpose.msra.mxu0 0.0
        %131 = vmatprep.subr.mxu0 0.0
        %132 = vmatpush1.xpose.msra.mxu0 0.0
        %133 = vmatprep.mubr.f32.mxu0 0.0
        %134 = vmatmul.mubr.f32.gmra.mrb[0].mxu0 %v64
        %v135 = vpop.f32.mrb[0].mxu0
        %v136 = vadd.f32 0.0, %v135
        %v137 = vpop.f32.mrb[0].mxu0
        %138 = vdwg.mxu0
        %v139 = vmul.f32 %v136, -1.0
        %v140 = vmax.f32 %v139, 1.0000001
        %v141 = vmul.f32 %v140, %v140
        %v142 = vsub.f32 %v141, 1.0
        %v143 = vrsqrt.pop %v142
        %v144 = vmul.f32 %v142, %v143
        %vm145 = vcmp.eq.f32.partialorder %v142, inf
        %v146 = vsel %vm145, %v142, %v144
        %vm147 = vcmp.eq.f32.partialorder %v142, 0.0
        %v148 = vand.u32 %v142, 2147483648
        %v149 = vsel %vm147, %v148, %v146
        %v150 = vadd.f32 %v140, %v149
        %v151 = vlog2.pop %v150
        %v152 = vmul.f32 %v151, 0.6931472
        %v153 = vmul.f32 %v152, %v152
        %v154 = vmin.f32 %v153, 50.0
        %v155 = vmul.f32 %v42, %v154
        %s156 = smul.u32 %s51, 16
        %s157 = scalar_lea.vmem %s4, %s156
        %v158 = vld [vmem:[%s157] sm:$0xff]
        %v159 = vld [vmem:[%s157 + $0x8] sm:$0x1]
        %v161 = vsel %vm62, %v158, 0
        %v164 = vsel %vm62, %v159, 0
        %166 = vmatprep.subr.mxu0 0.0
        %167 = vmatpush1.msra.mxu0 %v155
        %168 = vmatprep.subr.mxu0 0.0
        %169 = vmatpush1.msra.mxu0 0.0
        %170 = vmatprep.subr.mxu0 0.0
        %171 = vmatpush1.msra.mxu0 0.0
        %172 = vmatprep.subr.mxu0 0.0
        %173 = vmatpush1.msra.mxu0 0.0
        %174 = vmatprep.subr.mxu0 0.0
        %175 = vmatpush1.msra.mxu0 0.0
        %176 = vmatprep.subr.mxu0 0.0
        %177 = vmatpush1.msra.mxu0 0.0
        %178 = vmatprep.subr.mxu0 0.0
        %179 = vmatpush1.msra.mxu0 0.0
        %180 = vmatprep.subr.mxu0 0.0
        %181 = vmatpush1.msra.mxu0 0.0
        %182 = vmatprep.subr.mxu0 0.0
        %183 = vmatpush1.msra.mxu0 0.0
        %184 = vmatprep.subr.mxu0 0.0
        %185 = vmatpush1.msra.mxu0 0.0
        %186 = vmatprep.subr.mxu0 0.0
        %187 = vmatpush1.msra.mxu0 0.0
        %188 = vmatprep.subr.mxu0 0.0
        %189 = vmatpush1.msra.mxu0 0.0
        %190 = vmatprep.subr.mxu0 0.0
        %191 = vmatpush1.msra.mxu0 0.0
        %192 = vmatprep.subr.mxu0 0.0
        %193 = vmatpush1.msra.mxu0 0.0
        %194 = vmatprep.subr.mxu0 0.0
        %195 = vmatpush1.msra.mxu0 0.0
        %196 = vmatprep.subr.mxu0 0.0
        %197 = vmatpush1.msra.mxu0 0.0
        %198 = vmatprep.subr.mxu0 0.0
        %199 = vmatpush1.msra.mxu0 0.0
        %200 = vmatprep.subr.mxu0 0.0
        %201 = vmatpush1.msra.mxu0 0.0
        %202 = vmatprep.subr.mxu0 0.0
        %203 = vmatpush1.msra.mxu0 0.0
        %204 = vmatprep.subr.mxu0 0.0
        %205 = vmatpush1.msra.mxu0 0.0
        %206 = vmatprep.subr.mxu0 0.0
        %207 = vmatpush1.msra.mxu0 0.0
        %208 = vmatprep.subr.mxu0 0.0
        %209 = vmatpush1.msra.mxu0 0.0
        %210 = vmatprep.subr.mxu0 0.0
        %211 = vmatpush1.msra.mxu0 0.0
        %212 = vmatprep.subr.mxu0 0.0
        %213 = vmatpush1.msra.mxu0 0.0
        %214 = vmatprep.subr.mxu0 0.0
        %215 = vmatpush1.msra.mxu0 0.0
        %216 = vmatprep.subr.mxu0 0.0
        %217 = vmatpush1.msra.mxu0 0.0
        %218 = vmatprep.subr.mxu0 0.0
        %219 = vmatpush1.msra.mxu0 0.0
        %220 = vmatprep.subr.mxu0 0.0
        %221 = vmatpush1.msra.mxu0 0.0
        %222 = vmatprep.subr.mxu0 0.0
        %223 = vmatpush1.msra.mxu0 0.0
        %224 = vmatprep.subr.mxu0 0.0
        %225 = vmatpush1.msra.mxu0 0.0
        %226 = vmatprep.subr.mxu0 0.0
        %227 = vmatpush1.msra.mxu0 0.0
        %228 = vmatprep.subr.mxu0 0.0
        %229 = vmatpush1.msra.mxu0 0.0
        %230 = vmatprep.mubr.f32.mxu0 0.0
        %231 = vmatmul.mubr.f32.gmra.mrb[0].mxu0 %v161
        %v232 = vpop.f32.mrb[0].mxu0
        %v233 = vadd.f32 0.0, %v232
        %v234 = vpop.f32.mrb[0].mxu0
        %235 = vmatprep.mubr.f32.mxu0 0.0
        %236 = vmatmul.mubr.f32.gmra.mrb[0].mxu0 %v164
        %v237 = vpop.f32.mrb[0].mxu0
        %v238 = vadd.f32 0.0, %v237
        %v239 = vpop.f32.mrb[0].mxu0
        %240 = vdwg.mxu0
        %s241 = scalar_lea.vmem [#allocation2], %s156
        %v242 = vld [vmem:[%s241] sm:$0xff]
        %v243 = vld [vmem:[%s241 + $0x8] sm:$0x1]
        %v244 = vadd.f32 %v242, %v233
        %v245 = vadd.f32 %v243, %v238
        %246 = vst.msk [vmem:[%s241] sm:$0xff] %vm62, %v244
        %vm247 = vcmask 57344
        %248 = vst.msk [vmem:[%s241 + $0x8] sm:$0x1] %vm247, %v245
      $region30: #{tpu_custom_call.1} parent=24 // loop_footer
        %s55 = sadd.s32 1, %s51
      $region31: #{tpu_custom_call.1} parent=24 // loop_footer_branch
        %50 = sbr.rel target = $region27
      $region32: #{tpu_custom_call.1} parent=24 // loop_exit
        _
    $region25: #{tpu_custom_call.1} parent=1 // pred_fallthru
      _
    // Predicated region
    $region33: #{tpu_custom_call.1} parent=1 // pred_check
      %p249 = pneg %p20
    $region34: #{tpu_custom_call.1} parent=1 // pred_check_branch
      %251 = sbr.rel (%p249) target = $region36
    $region35: #{tpu_custom_call.1} parent=1 // pred_region
      %v252 = vlaneseq
      %v253 = vshrl.u32 %v252, 7
      %vm254 = vcmp.eq.s32.totalorder %v253, 0
      %v255 = vsel %vm254, 1, 0
      %v256 = vcvt.s32.f32 %v255
      %v257 = vsub.f32 1.0, %v256
      loop: start=0, step=1, limit=2
      $region37: #{tpu_custom_call.1} parent=35 // loop_pre_header
        _
      $region38: #{tpu_custom_call.1} parent=35 // loop_header
        %s259 = sphi 0, %s263
        %p260 = scmp.ge.s32.totalorder %s259, 2
      $region39: #{tpu_custom_call.1} parent=35 // loop_header_branch
        %262 = sbr.rel (%p260) target = $region43
      $region40: #{tpu_custom_call.1} parent=35 // loop_body
        %s264 = smul.u32 %s259, 16
        %s265 = scalar_lea.vmem [#allocation2], %s264
        %v266 = vld [vmem:[%s265] sm:$0xff]
        %v267 = vld [vmem:[%s265 + $0x8] sm:$0x1]
        %v268 = vmin.f32 %v267, -1e-15
        %v269 = vlaneseq
        %v270 = vshrl.u32 %v269, 7
        %v271 = vsub.s32 0, %v270
        %v272 = vrot.slane %v268, %v271
        %v273 = vrcp.pop %v272
        %v274 = vmul.f32 %v266, %v273
        %v275 = vmul.f32 %v274, %v274
        %vm276 = vcmask 64512
        %v277 = vsel %vm276, %v275, 0.0
        %v278 = vrot.slane %v277, 4
        %v279 = vadd.f32 %v277, %v278
        %v280 = vrot.slane %v279, 2
        %v281 = vadd.f32 %v279, %v280
        %v282 = vrot.slane %v281, 1
        %v283 = vadd.f32 %v281, %v282
        %v284 = vrsqrt.pop %v283
        %v285 = vmul.f32 %v283, %v284
        %vm286 = vcmp.eq.f32.partialorder %v283, inf
        %v287 = vsel %vm286, %v283, %v285
        %vm288 = vcmp.eq.f32.partialorder %v283, 0.0
        %v289 = vand.u32 %v283, 2147483648
        %v290 = vsel %vm288, %v289, %v287
        %v291 = vmax.f32 %v290, 1e-15
        %v292 = vmax.f32 %v291, -0.9999999
        %v293 = vmin.f32 %v292, 0.9999999
        %v294 = vadd.f32 %v293, 1.0
        %v295 = vsub.f32 1.0, %v293
        %v296 = vrcp.pop %v295
        %v297 = vmul.f32 %v294, %v296
        %v298 = vlog2.pop %v297
        %v299 = vmul.f32 %v298, 0.6931472
        %v300 = vmul.f32 %v299, 0.5
        %v301 = vmul.f32 %v300, 0.5
        %v302 = vtanh.pop %v301
        %v303 = vrcp.pop %v291
        %v304 = vmul.f32 %v274, %v303
        %v305 = vmul.f32 %v302, %v304
        %v306 = vmul.f32 %v305, %v305
        %v307 = vsel %vm276, %v306, 0.0
        %v308 = vrot.slane %v307, 4
        %v309 = vadd.f32 %v307, %v308
        %v310 = vrot.slane %v309, 2
        %v311 = vadd.f32 %v309, %v310
        %v312 = vrot.slane %v311, 1
        %v313 = vadd.f32 %v311, %v312
        %v314 = vsub.f32 1.0, %v313
        %v315 = vmax.f32 %v314, 1e-15
        %v316 = vadd.f32 %v313, 1.0
        %v317 = vrcp.pop %v315
        %v318 = vmul.f32 %v316, %v317
        %v319 = vmul.f32 %v318, %v256
        %v320 = vmul.f32 2.0, %v317
        %v321 = vmul.f32 %v320, %v305
        %v322 = vadd.f32 %v319, %v321
        %v323 = vmul.f32 %v322, %v257
        %v324 = vmul.f32 %v323, %v323
        %v325 = vsel %vm276, %v324, 0.0
        %v326 = vrot.slane %v325, 4
        %v327 = vadd.f32 %v325, %v326
        %v328 = vrot.slane %v327, 2
        %v329 = vadd.f32 %v327, %v328
        %v330 = vrot.slane %v329, 1
        %v331 = vadd.f32 %v329, %v330
        %v332 = vrsqrt.pop %v331
        %v333 = vmul.f32 %v331, %v332
        %vm334 = vcmp.eq.f32.partialorder %v331, inf
        %v335 = vsel %vm334, %v331, %v333
        %vm336 = vcmp.eq.f32.partialorder %v331, 0.0
        %v337 = vand.u32 %v331, 2147483648
        %v338 = vsel %vm336, %v337, %v335
        %v339 = vmax.f32 %v338, 1e-15
        %v340 = vmax.f32 %v322, 1.0000001
        %v341 = vmul.f32 %v340, %v340
        %v342 = vsub.f32 %v341, 1.0
        %v343 = vrsqrt.pop %v342
        %v344 = vmul.f32 %v342, %v343
        %vm345 = vcmp.eq.f32.partialorder %v342, inf
        %v346 = vsel %vm345, %v342, %v344
        %vm347 = vcmp.eq.f32.partialorder %v342, 0.0
        %v348 = vand.u32 %v342, 2147483648
        %v349 = vsel %vm347, %v348, %v346
        %v350 = vadd.f32 %v340, %v349
        %v351 = vlog2.pop %v350
        %v352 = vmul.f32 %v351, 0.6931472
        %v353 = vrcp.pop %v339
        %v354 = vmul.f32 %v352, %v353
        %v355 = vlaneseq
        %v356 = vshrl.u32 %v355, 7
        %v357 = vsub.s32 0, %v356
        %v358 = vrot.slane %v354, %v357
        %v359 = vmul.f32 %v323, %v358
        %v360 = vmax.f32 %v359, 0.0
        %v361 = vmul.f32 %v360, %v360
        %v362 = vsel %vm276, %v361, 0.0
        %v363 = vrot.slane %v362, 4
        %v364 = vadd.f32 %v362, %v363
        %v365 = vrot.slane %v364, 2
        %v366 = vadd.f32 %v364, %v365
        %v367 = vrot.slane %v366, 1
        %v368 = vadd.f32 %v366, %v367
        %v369 = vrsqrt.pop %v368
        %v370 = vmul.f32 %v368, %v369
        %vm371 = vcmp.eq.f32.partialorder %v368, inf
        %v372 = vsel %vm371, %v368, %v370
        %vm373 = vcmp.eq.f32.partialorder %v368, 0.0
        %v374 = vand.u32 %v368, 2147483648
        %v375 = vsel %vm373, %v374, %v372
        %v376 = vmax.f32 %v375, 1e-15
        %v377 = vmax.f32 %v376, -15.0
        %v378 = vmin.f32 %v377, 15.0
        %v379 = vmul.f32 %v378, 1.442695
        %v380 = vpow.pop %v379
        %v381 = vsub.f32 0.0, %v378
        %v382 = vmul.f32 %v381, 1.442695
        %v383 = vpow.pop %v382
        %v384 = vsub.f32 %v380, %v383
        %v385 = vmul.f32 %v384, 0.5
        %v386 = vrcp.pop %v376
        %v387 = vmul.f32 %v360, %v386
        %v388 = vmul.f32 %v385, %v387
        %v389 = vmul.f32 %v388, %v388
        %v390 = vsel %vm276, %v389, 0.0
        %v391 = vrot.slane %v390, 4
        %v392 = vadd.f32 %v390, %v391
        %v393 = vrot.slane %v392, 2
        %v394 = vadd.f32 %v392, %v393
        %v395 = vrot.slane %v394, 1
        %v396 = vadd.f32 %v394, %v395
        %v397 = vadd.f32 %v396, 1.0
        %v398 = vmax.f32 %v397, 1e-07
        %v399 = vrsqrt.pop %v398
        %v400 = vmul.f32 %v398, %v399
        %vm401 = vcmp.eq.f32.partialorder %v398, inf
        %v402 = vsel %vm401, %v398, %v400
        %vm403 = vcmp.eq.f32.partialorder %v398, 0.0
        %v404 = vand.u32 %v398, 2147483648
        %v405 = vsel %vm403, %v404, %v402
        %v406 = vmul.f32 %v405, %v256
        %v407 = vadd.f32 %v406, %v388
        %s408 = smul.u32 %s259, 8
        %s409 = scalar_lea.vmem [#allocation5], %s408
        %410 = vst.msk [vmem:[%s409] sm:$0xff] %vm276, %v407
      $region41: #{tpu_custom_call.1} parent=35 // loop_footer
        %s263 = sadd.s32 1, %s259
      $region42: #{tpu_custom_call.1} parent=35 // loop_footer_branch
        %258 = sbr.rel target = $region38
      $region43: #{tpu_custom_call.1} parent=35 // loop_exit
        _
    $region36: #{tpu_custom_call.1} parent=1 // pred_fallthru
      _
    // Predicated region
    $region44: #{tpu_custom_call.1} parent=1 // pred_check
      _
    $region45: #{tpu_custom_call.1} parent=1 // pred_check_branch
      %412 = sbr.rel (0) target = $region47
    $region46: #{tpu_custom_call.1} parent=1 // pred_region
      %s414 = ssub.s32 256, 256
      %415 = vsyncadd [#allocation6], %s414
      %s416 = sshll.u32 [#allocation5], 4
      %s417 = int_to_ptr.vmem [resolvable:$true] %s416
      %422 = dma.vmem_to_hbm [thread:$0]  %s417, 256, %s5, [#allocation6], 128, 128, 8
    $region47: #{tpu_custom_call.1} parent=1 // pred_fallthru
      _
    // Predicated region
    $region48: #{tpu_custom_call.1} parent=1 // pred_check
      _
    $region49: #{tpu_custom_call.1} parent=1 // pred_check_branch
      %424 = sbr.rel (0) target = $region51
    $region50: #{tpu_custom_call.1} parent=1 // pred_region
      %425 = dma.done [#allocation6], 256
    $region51: #{tpu_custom_call.1} parent=1 // pred_fallthru
      _
    %426 = vsyncpa [#allocation6], 1

</llo_original>
